<compile_context>
chip_gen: v7x
topology: tpu7x:2x2x1
jax: 0.10.0
libtpu: 0.0.40
codegen_flags: <defaults>
</compile_context>

<pallas_src>
import jax
import jax.numpy as jnp
from jax.experimental import pallas as pl
from jax.experimental.pallas import tpu as pltpu


def _h_sigmoid_kernel(x_ref, o_ref):
    x = x_ref[...]
    # relu6(x + 3) / 6 == clamp(x + 3, 0, 6) * (1/6).  Python float literals
    # are weakly typed, so bf16/fp16 inputs stay in their own dtype (matches
    # PyTorch eager); the final astype is a no-op when dtypes match.
    y = jnp.clip(x + 3.0, 0.0, 6.0) * (1.0 / 6.0)
    o_ref[...] = y.astype(o_ref.dtype)


def _round_up(x, m):
    return ((x + m - 1) // m) * m


def _pick_lanes(n_elems):
    # Largest lane width that divides the flat size -> no pad/slice copies and
    # unmasked (>=128-wide) stores.  Fall back to padding only when the size
    # is not a multiple of 128.
    for lanes in (512, 256, 128):
        if n_elems % lanes == 0:
            return lanes, False
    return 512, True


def h_sigmoid(x, *, tile_rows_f32=1024, min_pallas_elems=256 * 1024):
    """Applies relu6(x + 3) / 6 elementwise.  Any shape / float dtype."""
    orig_shape = x.shape
    orig_dtype = x.dtype
    n_elems = x.size

    if n_elems == 0:
        return x

    # Small-input fast path: pallas_call launch + per-step overhead dominates
    # tiny tensors, and plain XLA fuses this into surrounding ops for free.
    if n_elems < min_pallas_elems:
        return (jnp.clip(x + 3.0, 0.0, 6.0) * (1.0 / 6.0)).astype(orig_dtype)

    itemsize = jnp.dtype(orig_dtype).itemsize

    lanes, needs_pad = _pick_lanes(n_elems)
    rows = pl.cdiv(n_elems, lanes)
    padded_elems = rows * lanes

    x_flat = jnp.ravel(x)
    if needs_pad:
        # Rare ragged case (size % 128 != 0): pad < 512 elements.
        x_flat = jnp.pad(x_flat, (0, padded_elems - n_elems))
    x2d = x_flat.reshape(rows, lanes)

    # Keep blocks ~2 MiB regardless of dtype / lane width (1024 x 512 x 4B
    # baseline): per-step overhead stays amortized and the double-buffered
    # footprint stays at 8 MiB on every generation.
    tile_rows = tile_rows_f32 * max(1, 4 // itemsize) * (512 // lanes)

    # Sublane packing granularity: 8 (f32), 16 (bf16/fp16), 32 (int8/fp8).
    sublane = max(8, 32 // itemsize)

    if rows > sublane:
        # Guarantee >= 2 grid blocks so both v7x TensorCores get work; the
        # extra serial grid step on v5e/v6e costs ~0.35 us (noise).
        block_rows = min(tile_rows, _round_up(pl.cdiv(rows, 2), sublane))
    else:
        # Full-extent block: legal per the (8,128) rule when it equals the
        # array dim.
        block_rows = rows
    grid = (pl.cdiv(rows, block_rows),)

    cost = pl.CostEstimate(
        flops=4 * n_elems,
        transcendentals=0,
        bytes_accessed=2 * n_elems * itemsize,
    )

    out2d = pl.pallas_call(
        _h_sigmoid_kernel,
        out_shape=jax.ShapeDtypeStruct((rows, lanes), orig_dtype),
        grid_spec=pltpu.PrefetchScalarGridSpec(
            num_scalar_prefetch=0,
            grid=grid,
            in_specs=[pl.BlockSpec((block_rows, lanes), lambda i: (i, 0))],
            out_specs=pl.BlockSpec((block_rows, lanes), lambda i: (i, 0)),
        ),
        compiler_params=pltpu.CompilerParams(
            dimension_semantics=("parallel",),
        ),
        cost_estimate=cost,
    )(x2d)

    out_flat = out2d.reshape(-1)
    if needs_pad:
        out_flat = out_flat[:n_elems]
    return out_flat.reshape(orig_shape)


if __name__ == "__main__":
    key = jax.random.PRNGKey(0)
    # NCHW, small shapes: batch=2, channels=4, spatial=16x16 (2048 elements).
    x = jax.random.normal(key, (2, 4, 16, 16), dtype=jnp.float32) * 4.0

    # Force the Pallas path on this small test shape (the production default
    # would take the fused-XLA fast path for tensors this tiny).
    y = h_sigmoid(x, min_pallas_elems=0)
    y = jax.block_until_ready(y)

    # Reference check (pure JAX, matches relu6(x + 3) / 6).
    y_ref = jnp.clip(x + 3.0, 0.0, 6.0) / 6.0
    assert y.shape == x.shape and y.dtype == x.dtype
    assert jnp.allclose(y, y_ref, atol=1e-6), "mismatch vs reference"

    # Also exercise the small-input fast path once.
    y_fast = jax.block_until_ready(h_sigmoid(x))
    assert jnp.allclose(y_fast, y_ref, atol=1e-6), "fast path mismatch"

    print("KERNEL_OK")
</pallas_src>

<mosaic_0001>
module attributes {stable_mosaic.version = 11 : i64} {
  func.func @_h_sigmoid_kernel(%arg0: i32, %arg1: memref<4x512xf32, #tpu.memory_space<vmem>>, %arg2: memref<4x512xf32, #tpu.memory_space<vmem>>) attributes {dimension_semantics = [#tpu.dimension_semantics<parallel>], iteration_bounds = array<i64: 1>, scalar_prefetch = 0 : i64, scratch_operands = 0 : i64, tpu.core_type = #tpu.core_type<tc>, window_params = [{transform_indices = @transform_0, window_bounds = array<i64: 4, 512>}, {transform_indices = @transform_1, window_bounds = array<i64: 4, 512>}]} {
    %c0 = arith.constant 0 : index
    %c0_0 = arith.constant 0 : index
    %0 = vector.load %arg1[%c0, %c0_0] : memref<4x512xf32, #tpu.memory_space<vmem>>, vector<4x512xf32>
    %cst = arith.constant 3.000000e+00 : f32
    %1 = vector.broadcast %cst : f32 to vector<4x512xf32>
    %2 = arith.addf %0, %1 : vector<4x512xf32>
    %cst_1 = arith.constant 0.000000e+00 : f32
    %cst_2 = arith.constant 6.000000e+00 : f32
    %3 = vector.broadcast %cst_1 : f32 to vector<4x512xf32>
    %4 = arith.maximumf %3, %2 : vector<4x512xf32>
    %5 = vector.broadcast %cst_2 : f32 to vector<4x512xf32>
    %6 = arith.minimumf %5, %4 : vector<4x512xf32>
    %cst_3 = arith.constant 0.166666672 : f32
    %7 = vector.broadcast %cst_3 : f32 to vector<4x512xf32>
    %8 = arith.mulf %6, %7 : vector<4x512xf32>
    %c0_4 = arith.constant 0 : index
    %c0_5 = arith.constant 0 : index
    %9 = vector.load %arg2[%c0_4, %c0_5] : memref<4x512xf32, #tpu.memory_space<vmem>>, vector<4x512xf32>
    tpu.vector_store %arg2[%c0_4, %c0_5], %8 {strides = array<i32>} : memref<4x512xf32, #tpu.memory_space<vmem>>, vector<4x512xf32>,
    return
  }
  func.func @transform_0(%arg0: i32) -> (i32, i32) {
    %c0_i32 = arith.constant 0 : i32
    %c0_i32_0 = arith.constant 0 : i32
    return %arg0, %c0_i32 : i32, i32
  }
  func.func @transform_1(%arg0: i32) -> (i32, i32) {
    %c0_i32 = arith.constant 0 : i32
    %c0_i32_0 = arith.constant 0 : i32
    return %arg0, %c0_i32 : i32, i32
  }
}

</mosaic_0001>

<llo_original>
// kernel: tpu_custom_call.1
$region0: #{tpu_custom_call.1}
  #allocation0 [shape = 'u32[]', space=smem, size = 0x4, offset = 0x4, fixed_abs, tag = 'smem constant byte address 0x4 - core index']
  #allocation1 [shape = 'u32[144,128]{1,0:T(1,128)}', space=vmem, size = 0x12000, scoped, tag = 'internal scratch']
  %s0 = inlined_call_operand.hbm [shape: f32[4,512], index: 0, kind: input, shape index: {}]
  %s1 = inlined_call_operand.hbm [shape: f32[4,512], index: 1, kind: output, shape index: {}]
  %s2 = sld [smem:[#allocation0]]
  $region18: #{tpu_custom_call.1} parent=0
    _
  %s4 = ssub.s32 1, %s2
  %s5 = scalar_select 0, %s4, %s2
  $region1: #{tpu_custom_call.1} parent=0
    #allocation2 [shape = 'u8[8192]{0}', space=vmem, size = 0x2000, scoped, tag = 'input window, operand 0, single buffered']
    #allocation3 [shape = 's32[1]{0}', space=sflag, size = 0x4, scoped, tag = 'scoped memory for tpu_custom_call.1']
    #allocation4 [shape = 's32[1]{0}', space=sflag, size = 0x4, scoped, tag = 'scoped memory for tpu_custom_call.1']
    #allocation5 [shape = 'u8[8192]{0}', space=vmem, size = 0x2000, scoped, tag = 'output window, operand 0, single buffered']
    %6 = vsyncpa [#allocation3], 0
    %7 = vsyncpa [#allocation4], 0
    // Predicated region
    $region2: #{tpu_custom_call.1} parent=1 // pred_check
      _
    $region3: #{tpu_custom_call.1} parent=1 // pred_check_branch
      %9 = sbr.rel (0) target = $region5
    $region4: #{tpu_custom_call.1} parent=1 // pred_region
      %s11 = ssub.s32 256, 256
      %12 = vsyncadd [#allocation3], %s11
      %s14 = sshll.u32 [#allocation2], 4
      %s15 = int_to_ptr.vmem [resolvable:$true] %s14
      %17 = dma.hbm_to_vmem [thread:$0]  %s0, 256, %s15, [#allocation3]
    $region5: #{tpu_custom_call.1} parent=1 // pred_fallthru
      _
    // Predicated region
    $region6: #{tpu_custom_call.1} parent=1 // pred_check
      _
    $region7: #{tpu_custom_call.1} parent=1 // pred_check_branch
      %19 = sbr.rel (0) target = $region9
    $region8: #{tpu_custom_call.1} parent=1 // pred_region
      %20 = dma.done [#allocation3], 256
    $region9: #{tpu_custom_call.1} parent=1 // pred_fallthru
      _
    %v21 = vld [vmem:[#allocation2] sm:$0xff]
    %v22 = vld [vmem:[#allocation2 + $0x8] sm:$0xff]
    %v23 = vadd.f32 %v21, 3.0
    %v24 = vadd.f32 %v22, 3.0
    %v25 = vmax.f32 %v23, 0.0
    %v26 = vmax.f32 %v24, 0.0
    %v27 = vmin.f32 %v25, 6.0
    %v28 = vmin.f32 %v26, 6.0
    %v29 = vmul.f32 %v27, 0.16666667
    %v30 = vmul.f32 %v28, 0.16666667
    %31 = vst [vmem:[#allocation5] sm:$0xff] %v29
    %32 = vst [vmem:[#allocation5 + $0x8] sm:$0xff] %v30
    // Predicated region
    $region10: #{tpu_custom_call.1} parent=1 // pred_check
      _
    $region11: #{tpu_custom_call.1} parent=1 // pred_check_branch
      %34 = sbr.rel (0) target = $region13
    $region12: #{tpu_custom_call.1} parent=1 // pred_region
      %s36 = ssub.s32 256, 256
      %37 = vsyncadd [#allocation4], %s36
      %s39 = sshll.u32 [#allocation5], 4
      %s40 = int_to_ptr.vmem [resolvable:$true] %s39
      %42 = dma.vmem_to_hbm [thread:$0]  %s40, 256, %s1, [#allocation4]
    $region13: #{tpu_custom_call.1} parent=1 // pred_fallthru
      _
    // Predicated region
    $region14: #{tpu_custom_call.1} parent=1 // pred_check
      _
    $region15: #{tpu_custom_call.1} parent=1 // pred_check_branch
      %44 = sbr.rel (0) target = $region17
    $region16: #{tpu_custom_call.1} parent=1 // pred_region
      %45 = dma.done [#allocation4], 256
    $region17: #{tpu_custom_call.1} parent=1 // pred_fallthru
      _
    %46 = vsyncpa [#allocation3], 1
    %47 = vsyncpa [#allocation4], 1

</llo_original>
